<compile_context>
chip_gen: v7x
topology: tpu7x:2x2x1
jax: 0.10.0
libtpu: 0.0.40
codegen_flags: <defaults>
</compile_context>

<pallas_src>
import functools

import jax
import jax.numpy as jnp
from jax.experimental import pallas as pl
from jax.experimental.pallas import tpu as pltpu


def _round_up(v, m):
    return ((v + m - 1) // m) * m


def _mdconv_kernel(x_ref, w_ref, b_ref, o_ref, p_ref, *, tap_offsets, cin, trw):
    """One (batch, row-tile) grid step.

    x_ref: (1, 1, Cin, Lt)   flat zero-padded input slab for this tile (+ slack)
    w_ref: (Cout, KP)        packed weights, KP = D*K*K*Cin (stays resident)
    b_ref: (Cout, 1)         summed bias (comb_mode='sum')  (stays resident)
    o_ref: (1, Cout, TRW)    lane-dense output tile, TRW = TH * Wp
    p_ref: (KP, TRW)         VMEM scratch: in-kernel im2col patch matrix
    """
    # ---- in-kernel im2col: D*K*K static contiguous slices of the flat slab ----
    # Tap (d, kh, kw) for every output lane j = h*Wp + w' is slab[s + j] with a
    # purely static s, so each tap is one contiguous (Cin, TRW) slice.
    for i, s in enumerate(tap_offsets):
        p_ref[i * cin:(i + 1) * cin, :] = x_ref[0, 0, :, s:s + trw]

    # ---- single fused MXU contraction + f32 bias epilogue (VPU) ---------------
    acc = jnp.dot(w_ref[...], p_ref[...], preferred_element_type=jnp.float32)
    o_ref[0] = (acc + b_ref[...]).astype(o_ref.dtype)


def multidilated_conv(x_nchw, weights, biases, *, kernel_size=3, padding=1,
                      min_dilation=1, dilation_num=3,
                      vmem_budget_bytes=12 * 1024 * 1024):
    """Forward of MultidilatedConv (comb_mode='sum').

    x_nchw:  (N, Cin, H, W) float32
    weights: (D, K, K, Cin, Cout)  -- conv i weight element weights[i, kh, kw, cin, cout]
    biases:  (D, Cout)
    returns  (N, Cout, H, W) float32 (NCHW, matching the PyTorch module)
    """
    N, Cin, H, W = x_nchw.shape
    D, K, K2, Cin_w, Cout = weights.shape
    assert D == dilation_num and K == kernel_size and K2 == kernel_size and Cin_w == Cin
    # 'sum' mode requires every branch to produce the same HxW output ("same" conv).
    assert 2 * padding == kernel_size - 1, \
        "sum mode requires 'same' convs (padding == (kernel_size - 1) // 2)"

    dilations = tuple(min_dilation * (2 ** i) for i in range(dilation_num))
    max_pad = padding * dilations[-1]
    Hp, Wp = H + 2 * max_pad, W + 2 * max_pad
    KP = D * K * K * Cin                                     # 108 for default config

    # Flat-slab offset of each tap.  Branch with dilation d (conv padding = padding*d):
    # output pixel (h, w) reads padded pixel (h + base + kh*d, w + base + kw*d),
    # base = max_pad - padding*d >= 0.  Row order matches weights.reshape(KP, Cout).
    tap_offsets = []
    for d in dilations:
        base = max_pad - padding * d
        for kh in range(K):
            for kw in range(K):
                tap_offsets.append((base + kh * d) * Wp + (base + kw * d))

    # ---- row-tile selection (per-generation VMEM budget; >=2 grid steps) -------
    def _step_bytes(th):
        thp = th + 2 * max_pad
        lt = _round_up(thp * Wp + 2 * max_pad, 128)
        return 4 * (KP * th * Wp            # patch scratch
                    + 2 * Cin * lt          # double-buffered input slab
                    + 2 * Cout * th * Wp)   # double-buffered output tile

    TH = H
    want_split = (_step_bytes(H) > vmem_budget_bytes) or (N == 1 and H > 1)
    if want_split:
        cands = [th for th in range(H - 1, 0, -1)
                 if H % th == 0 and (th * Wp) % 128 == 0
                 and _step_bytes(th) <= vmem_budget_bytes]
        if cands:
            TH = cands[0]
        # TODO(synk): if no legal row tile exists (huge image with awkward Wp),
        # we fall back to one un-tiled step per batch element.

    T = H // TH
    THp = TH + 2 * max_pad
    TRW = TH * Wp
    # Slack so the last tap's contiguous slice stays in-bounds (reads only feed
    # garbage columns that are cropped after the kernel).
    Lt = _round_up(THp * Wp + 2 * max_pad, 128)

    # ---- wrapper-side prep: zero-pad, (optionally) halo'd row tiles, flatten ----
    x = x_nchw.astype(jnp.float32)
    xp = jnp.pad(x, ((0, 0), (0, 0), (max_pad, max_pad), (max_pad, max_pad)))
    if T == 1:
        tiles = xp.reshape(N, 1, Cin, Hp * Wp)
    else:
        tiles = jnp.stack([xp[:, :, t * TH:t * TH + THp, :] for t in range(T)], axis=1)
        tiles = tiles.reshape(N, T, Cin, THp * Wp)
    tiles = jnp.pad(tiles, ((0, 0), (0, 0), (0, 0), (0, Lt - THp * Wp)))

    # Packed weights (Cout, KP); summed bias added in the kernel epilogue (f32).
    w_packed = weights.astype(jnp.float32).reshape(KP, Cout).T           # (Cout, KP)
    bias_sum = jnp.sum(biases.astype(jnp.float32), axis=0).reshape(Cout, 1)

    kernel = functools.partial(_mdconv_kernel, tap_offsets=tuple(tap_offsets),
                               cin=Cin, trw=TRW)

    out_flat = pl.pallas_call(
        kernel,
        out_shape=jax.ShapeDtypeStruct((N, Cout, H * Wp), jnp.float32),
        grid_spec=pltpu.PrefetchScalarGridSpec(
            num_scalar_prefetch=0,
            grid=(N, T),
            in_specs=[
                pl.BlockSpec((1, 1, Cin, Lt), lambda n, t: (n, t, 0, 0)),
                pl.BlockSpec((Cout, KP), lambda n, t: (0, 0)),   # weights resident
                pl.BlockSpec((Cout, 1), lambda n, t: (0, 0)),    # bias resident
            ],
            out_specs=pl.BlockSpec((1, Cout, TRW), lambda n, t: (n, 0, t)),
            scratch_shapes=[pltpu.VMEM((KP, TRW), jnp.float32)],
        ),
        compiler_params=pltpu.CompilerParams(
            dimension_semantics=("parallel", "parallel"),
            vmem_limit_bytes=32 * 1024 * 1024,   # safe on v5e/v6e/v7x scoped VMEM
        ),
    )(tiles, w_packed, bias_sum)

    # (N, Cout, H*Wp): already NCHW up to cropping the Wp-domain garbage columns.
    return out_flat.reshape(N, Cout, H, Wp)[:, :, :, :W]


def _reference(x_nchw, weights, biases, *, kernel_size=3, padding=1,
               min_dilation=1, dilation_num=3):
    """Pure-JAX reference (lax conv) mirroring the PyTorch forward with comb_mode='sum'."""
    dilations = [min_dilation * (2 ** i) for i in range(dilation_num)]
    out = None
    for i, d in enumerate(dilations):
        w_oihw = jnp.transpose(weights[i], (3, 2, 0, 1))
        y = jax.lax.conv_general_dilated(
            x_nchw, w_oihw, window_strides=(1, 1),
            padding=[(padding * d, padding * d)] * 2,
            rhs_dilation=(d, d),
            dimension_numbers=("NCHW", "OIHW", "NCHW"),
            precision=jax.lax.Precision.HIGHEST)
        y = y + biases[i][None, :, None, None]
        out = y if out is None else out + y
    return out


if __name__ == "__main__":
    # Module config: in_dim=4, out_dim=8, kernel_size=3, comb_mode='sum' (defaults).
    N, Cin, H, W = 2, 4, 16, 16
    Cout, K, D = 8, 3, 3

    key = jax.random.PRNGKey(0)
    kx, kw, kb = jax.random.split(key, 3)
    x = jax.random.normal(kx, (N, Cin, H, W), dtype=jnp.float32)
    weights = jax.random.normal(kw, (D, K, K, Cin, Cout), dtype=jnp.float32) * 0.1
    biases = jax.random.normal(kb, (D, Cout), dtype=jnp.float32) * 0.1

    out = jax.block_until_ready(multidilated_conv(x, weights, biases))
    ref = jax.block_until_ready(_reference(x, weights, biases))

    assert out.shape == (N, Cout, H, W)
    max_err = float(jnp.max(jnp.abs(out - ref)))
    assert jnp.allclose(out, ref, atol=1e-4, rtol=1e-4), max_err

    print("KERNEL_OK")
</pallas_src>

<mosaic_0001>
module attributes {stable_mosaic.version = 11 : i64} {
  func.func @_mdconv_kernel(%arg0: i32, %arg1: i32, %arg2: memref<1x1x4x640xf32, #tpu.memory_space<vmem>>, %arg3: memref<8x108xf32, #tpu.memory_space<vmem>>, %arg4: memref<8x1xf32, #tpu.memory_space<vmem>>, %arg5: memref<1x8x384xf32, #tpu.memory_space<vmem>>, %arg6: memref<108x384xf32, #tpu.memory_space<vmem>>) attributes {dimension_semantics = [#tpu.dimension_semantics<parallel>, #tpu.dimension_semantics<parallel>], iteration_bounds = array<i64: 2, 1>, scalar_prefetch = 0 : i64, scratch_operands = 1 : i64, tpu.core_type = #tpu.core_type<tc>, window_params = [{transform_indices = @transform_0, window_bounds = array<i64: 1, 1, 4, 640>}, {pipeline_mode = #tpu.pipeline_mode<synchronous>, transform_indices = @transform_1, window_bounds = array<i64: 8, 108>}, {pipeline_mode = #tpu.pipeline_mode<synchronous>, transform_indices = @transform_2, window_bounds = array<i64: 8, 1>}, {transform_indices = @transform_3, window_bounds = array<i64: 1, 8, 384>}]} {
    %c0 = arith.constant 0 : index
    %c0_0 = arith.constant 0 : index
    %c0_1 = arith.constant 0 : index
    %c75 = arith.constant 75 : index
    %0 = vector.load %arg2[%c0, %c0_0, %c0_1, %c75] : memref<1x1x4x640xf32, #tpu.memory_space<vmem>>, vector<1x1x4x384xf32>
    %1 = vector.shape_cast %0 : vector<1x1x4x384xf32> to vector<4x384xf32>
    %c0_2 = arith.constant 0 : index
    %c0_3 = arith.constant 0 : index
    %2 = vector.load %arg6[%c0_2, %c0_3] : memref<108x384xf32, #tpu.memory_space<vmem>>, vector<4x384xf32>
    tpu.vector_store %arg6[%c0_2, %c0_3], %1 {strides = array<i32>} : memref<108x384xf32, #tpu.memory_space<vmem>>, vector<4x384xf32>,
    %c0_4 = arith.constant 0 : index
    %c0_5 = arith.constant 0 : index
    %c0_6 = arith.constant 0 : index
    %c76 = arith.constant 76 : index
    %3 = vector.load %arg2[%c0_4, %c0_5, %c0_6, %c76] : memref<1x1x4x640xf32, #tpu.memory_space<vmem>>, vector<1x1x4x384xf32>
    %4 = vector.shape_cast %3 : vector<1x1x4x384xf32> to vector<4x384xf32>
    %c4 = arith.constant 4 : index
    %c0_7 = arith.constant 0 : index
    %5 = vector.load %arg6[%c4, %c0_7] : memref<108x384xf32, #tpu.memory_space<vmem>>, vector<4x384xf32>
    tpu.vector_store %arg6[%c4, %c0_7], %4 {strides = array<i32>} : memref<108x384xf32, #tpu.memory_space<vmem>>, vector<4x384xf32>,
    %c0_8 = arith.constant 0 : index
    %c0_9 = arith.constant 0 : index
    %c0_10 = arith.constant 0 : index
    %c77 = arith.constant 77 : index
    %6 = vector.load %arg2[%c0_8, %c0_9, %c0_10, %c77] : memref<1x1x4x640xf32, #tpu.memory_space<vmem>>, vector<1x1x4x384xf32>
    %7 = vector.shape_cast %6 : vector<1x1x4x384xf32> to vector<4x384xf32>
    %c8 = arith.constant 8 : index
    %c0_11 = arith.constant 0 : index
    %8 = vector.load %arg6[%c8, %c0_11] : memref<108x384xf32, #tpu.memory_space<vmem>>, vector<4x384xf32>
    tpu.vector_store %arg6[%c8, %c0_11], %7 {strides = array<i32>} : memref<108x384xf32, #tpu.memory_space<vmem>>, vector<4x384xf32>,
    %c0_12 = arith.constant 0 : index
    %c0_13 = arith.constant 0 : index
    %c0_14 = arith.constant 0 : index
    %c99 = arith.constant 99 : index
    %9 = vector.load %arg2[%c0_12, %c0_13, %c0_14, %c99] : memref<1x1x4x640xf32, #tpu.memory_space<vmem>>, vector<1x1x4x384xf32>
    %10 = vector.shape_cast %9 : vector<1x1x4x384xf32> to vector<4x384xf32>
    %c12 = arith.constant 12 : index
    %c0_15 = arith.constant 0 : index
    %11 = vector.load %arg6[%c12, %c0_15] : memref<108x384xf32, #tpu.memory_space<vmem>>, vector<4x384xf32>
    tpu.vector_store %arg6[%c12, %c0_15], %10 {strides = array<i32>} : memref<108x384xf32, #tpu.memory_space<vmem>>, vector<4x384xf32>,
    %c0_16 = arith.constant 0 : index
    %c0_17 = arith.constant 0 : index
    %c0_18 = arith.constant 0 : index
    %c100 = arith.constant 100 : index
    %12 = vector.load %arg2[%c0_16, %c0_17, %c0_18, %c100] : memref<1x1x4x640xf32, #tpu.memory_space<vmem>>, vector<1x1x4x384xf32>
    %13 = vector.shape_cast %12 : vector<1x1x4x384xf32> to vector<4x384xf32>
    %c16 = arith.constant 16 : index
    %c0_19 = arith.constant 0 : index
    %14 = vector.load %arg6[%c16, %c0_19] : memref<108x384xf32, #tpu.memory_space<vmem>>, vector<4x384xf32>
    tpu.vector_store %arg6[%c16, %c0_19], %13 {strides = array<i32>} : memref<108x384xf32, #tpu.memory_space<vmem>>, vector<4x384xf32>,
    %c0_20 = arith.constant 0 : index
    %c0_21 = arith.constant 0 : index
    %c0_22 = arith.constant 0 : index
    %c101 = arith.constant 101 : index
    %15 = vector.load %arg2[%c0_20, %c0_21, %c0_22, %c101] : memref<1x1x4x640xf32, #tpu.memory_space<vmem>>, vector<1x1x4x384xf32>
    %16 = vector.shape_cast %15 : vector<1x1x4x384xf32> to vector<4x384xf32>
    %c20 = arith.constant 20 : index
    %c0_23 = arith.constant 0 : index
    %17 = vector.load %arg6[%c20, %c0_23] : memref<108x384xf32, #tpu.memory_space<vmem>>, vector<4x384xf32>
    tpu.vector_store %arg6[%c20, %c0_23], %16 {strides = array<i32>} : memref<108x384xf32, #tpu.memory_space<vmem>>, vector<4x384xf32>,
    %c0_24 = arith.constant 0 : index
    %c0_25 = arith.constant 0 : index
    %c0_26 = arith.constant 0 : index
    %c123 = arith.constant 123 : index
    %18 = vector.load %arg2[%c0_24, %c0_25, %c0_26, %c123] : memref<1x1x4x640xf32, #tpu.memory_space<vmem>>, vector<1x1x4x384xf32>
    %19 = vector.shape_cast %18 : vector<1x1x4x384xf32> to vector<4x384xf32>
    %c24 = arith.constant 24 : index
    %c0_27 = arith.constant 0 : index
    %20 = vector.load %arg6[%c24, %c0_27] : memref<108x384xf32, #tpu.memory_space<vmem>>, vector<4x384xf32>
    tpu.vector_store %arg6[%c24, %c0_27], %19 {strides = array<i32>} : memref<108x384xf32, #tpu.memory_space<vmem>>, vector<4x384xf32>,
    %c0_28 = arith.constant 0 : index
    %c0_29 = arith.constant 0 : index
    %c0_30 = arith.constant 0 : index
    %c124 = arith.constant 124 : index
    %21 = vector.load %arg2[%c0_28, %c0_29, %c0_30, %c124] : memref<1x1x4x640xf32, #tpu.memory_space<vmem>>, vector<1x1x4x384xf32>
    %22 = vector.shape_cast %21 : vector<1x1x4x384xf32> to vector<4x384xf32>
    %c28 = arith.constant 28 : index
    %c0_31 = arith.constant 0 : index
    %23 = vector.load %arg6[%c28, %c0_31] : memref<108x384xf32, #tpu.memory_space<vmem>>, vector<4x384xf32>
    tpu.vector_store %arg6[%c28, %c0_31], %22 {strides = array<i32>} : memref<108x384xf32, #tpu.memory_space<vmem>>, vector<4x384xf32>,
    %c0_32 = arith.constant 0 : index
    %c0_33 = arith.constant 0 : index
    %c0_34 = arith.constant 0 : index
    %c125 = arith.constant 125 : index
    %24 = vector.load %arg2[%c0_32, %c0_33, %c0_34, %c125] : memref<1x1x4x640xf32, #tpu.memory_space<vmem>>, vector<1x1x4x384xf32>
    %25 = vector.shape_cast %24 : vector<1x1x4x384xf32> to vector<4x384xf32>
    %c32 = arith.constant 32 : index
    %c0_35 = arith.constant 0 : index
    %26 = vector.load %arg6[%c32, %c0_35] : memref<108x384xf32, #tpu.memory_space<vmem>>, vector<4x384xf32>
    tpu.vector_store %arg6[%c32, %c0_35], %25 {strides = array<i32>} : memref<108x384xf32, #tpu.memory_space<vmem>>, vector<4x384xf32>,
    %c0_36 = arith.constant 0 : index
    %c0_37 = arith.constant 0 : index
    %c0_38 = arith.constant 0 : index
    %c50 = arith.constant 50 : index
    %27 = vector.load %arg2[%c0_36, %c0_37, %c0_38, %c50] : memref<1x1x4x640xf32, #tpu.memory_space<vmem>>, vector<1x1x4x384xf32>
    %28 = vector.shape_cast %27 : vector<1x1x4x384xf32> to vector<4x384xf32>
    %c36 = arith.constant 36 : index
    %c0_39 = arith.constant 0 : index
    %29 = vector.load %arg6[%c36, %c0_39] : memref<108x384xf32, #tpu.memory_space<vmem>>, vector<4x384xf32>
    tpu.vector_store %arg6[%c36, %c0_39], %28 {strides = array<i32>} : memref<108x384xf32, #tpu.memory_space<vmem>>, vector<4x384xf32>,
    %c0_40 = arith.constant 0 : index
    %c0_41 = arith.constant 0 : index
    %c0_42 = arith.constant 0 : index
    %c52 = arith.constant 52 : index
    %30 = vector.load %arg2[%c0_40, %c0_41, %c0_42, %c52] : memref<1x1x4x640xf32, #tpu.memory_space<vmem>>, vector<1x1x4x384xf32>
    %31 = vector.shape_cast %30 : vector<1x1x4x384xf32> to vector<4x384xf32>
    %c40 = arith.constant 40 : index
    %c0_43 = arith.constant 0 : index
    %32 = vector.load %arg6[%c40, %c0_43] : memref<108x384xf32, #tpu.memory_space<vmem>>, vector<4x384xf32>
    tpu.vector_store %arg6[%c40, %c0_43], %31 {strides = array<i32>} : memref<108x384xf32, #tpu.memory_space<vmem>>, vector<4x384xf32>,
    %c0_44 = arith.constant 0 : index
    %c0_45 = arith.constant 0 : index
    %c0_46 = arith.constant 0 : index
    %c54 = arith.constant 54 : index
    %33 = vector.load %arg2[%c0_44, %c0_45, %c0_46, %c54] : memref<1x1x4x640xf32, #tpu.memory_space<vmem>>, vector<1x1x4x384xf32>
    %34 = vector.shape_cast %33 : vector<1x1x4x384xf32> to vector<4x384xf32>
    %c44 = arith.constant 44 : index
    %c0_47 = arith.constant 0 : index
    %35 = vector.load %arg6[%c44, %c0_47] : memref<108x384xf32, #tpu.memory_space<vmem>>, vector<4x384xf32>
    tpu.vector_store %arg6[%c44, %c0_47], %34 {strides = array<i32>} : memref<108x384xf32, #tpu.memory_space<vmem>>, vector<4x384xf32>,
    %c0_48 = arith.constant 0 : index
    %c0_49 = arith.constant 0 : index
    %c0_50 = arith.constant 0 : index
    %c98 = arith.constant 98 : index
    %36 = vector.load %arg2[%c0_48, %c0_49, %c0_50, %c98] : memref<1x1x4x640xf32, #tpu.memory_space<vmem>>, vector<1x1x4x384xf32>
    %37 = vector.shape_cast %36 : vector<1x1x4x384xf32> to vector<4x384xf32>
    %c48 = arith.constant 48 : index
    %c0_51 = arith.constant 0 : index
    %38 = vector.load %arg6[%c48, %c0_51] : memref<108x384xf32, #tpu.memory_space<vmem>>, vector<4x384xf32>
    tpu.vector_store %arg6[%c48, %c0_51], %37 {strides = array<i32>} : memref<108x384xf32, #tpu.memory_space<vmem>>, vector<4x384xf32>,
    %c0_52 = arith.constant 0 : index
    %c0_53 = arith.constant 0 : index
    %c0_54 = arith.constant 0 : index
    %c100_55 = arith.constant 100 : index
    %39 = vector.load %arg2[%c0_52, %c0_53, %c0_54, %c100_55] : memref<1x1x4x640xf32, #tpu.memory_space<vmem>>, vector<1x1x4x384xf32>
    %40 = vector.shape_cast %39 : vector<1x1x4x384xf32> to vector<4x384xf32>
    %c52_56 = arith.constant 52 : index
    %c0_57 = arith.constant 0 : index
    %41 = vector.load %arg6[%c52_56, %c0_57] : memref<108x384xf32, #tpu.memory_space<vmem>>, vector<4x384xf32>
    tpu.vector_store %arg6[%c52_56, %c0_57], %40 {strides = array<i32>} : memref<108x384xf32, #tpu.memory_space<vmem>>, vector<4x384xf32>,
    %c0_58 = arith.constant 0 : index
    %c0_59 = arith.constant 0 : index
    %c0_60 = arith.constant 0 : index
    %c102 = arith.constant 102 : index
    %42 = vector.load %arg2[%c0_58, %c0_59, %c0_60, %c102] : memref<1x1x4x640xf32, #tpu.memory_space<vmem>>, vector<1x1x4x384xf32>
    %43 = vector.shape_cast %42 : vector<1x1x4x384xf32> to vector<4x384xf32>
    %c56 = arith.constant 56 : index
    %c0_61 = arith.constant 0 : index
    %44 = vector.load %arg6[%c56, %c0_61] : memref<108x384xf32, #tpu.memory_space<vmem>>, vector<4x384xf32>
    tpu.vector_store %arg6[%c56, %c0_61], %43 {strides = array<i32>} : memref<108x384xf32, #tpu.memory_space<vmem>>, vector<4x384xf32>,
    %c0_62 = arith.constant 0 : index
    %c0_63 = arith.constant 0 : index
    %c0_64 = arith.constant 0 : index
    %c146 = arith.constant 146 : index
    %45 = vector.load %arg2[%c0_62, %c0_63, %c0_64, %c146] : memref<1x1x4x640xf32, #tpu.memory_space<vmem>>, vector<1x1x4x384xf32>
    %46 = vector.shape_cast %45 : vector<1x1x4x384xf32> to vector<4x384xf32>
    %c60 = arith.constant 60 : index
    %c0_65 = arith.constant 0 : index
    %47 = vector.load %arg6[%c60, %c0_65] : memref<108x384xf32, #tpu.memory_space<vmem>>, vector<4x384xf32>
    tpu.vector_store %arg6[%c60, %c0_65], %46 {strides = array<i32>} : memref<108x384xf32, #tpu.memory_space<vmem>>, vector<4x384xf32>,
    %c0_66 = arith.constant 0 : index
    %c0_67 = arith.constant 0 : index
    %c0_68 = arith.constant 0 : index
    %c148 = arith.constant 148 : index
    %48 = vector.load %arg2[%c0_66, %c0_67, %c0_68, %c148] : memref<1x1x4x640xf32, #tpu.memory_space<vmem>>, vector<1x1x4x384xf32>
    %49 = vector.shape_cast %48 : vector<1x1x4x384xf32> to vector<4x384xf32>
    %c64 = arith.constant 64 : index
    %c0_69 = arith.constant 0 : index
    %50 = vector.load %arg6[%c64, %c0_69] : memref<108x384xf32, #tpu.memory_space<vmem>>, vector<4x384xf32>
    tpu.vector_store %arg6[%c64, %c0_69], %49 {strides = array<i32>} : memref<108x384xf32, #tpu.memory_space<vmem>>, vector<4x384xf32>,
    %c0_70 = arith.constant 0 : index
    %c0_71 = arith.constant 0 : index
    %c0_72 = arith.constant 0 : index
    %c150 = arith.constant 150 : index
    %51 = vector.load %arg2[%c0_70, %c0_71, %c0_72, %c150] : memref<1x1x4x640xf32, #tpu.memory_space<vmem>>, vector<1x1x4x384xf32>
    %52 = vector.shape_cast %51 : vector<1x1x4x384xf32> to vector<4x384xf32>
    %c68 = arith.constant 68 : index
    %c0_73 = arith.constant 0 : index
    %53 = vector.load %arg6[%c68, %c0_73] : memref<108x384xf32, #tpu.memory_space<vmem>>, vector<4x384xf32>
    tpu.vector_store %arg6[%c68, %c0_73], %52 {strides = array<i32>} : memref<108x384xf32, #tpu.memory_space<vmem>>, vector<4x384xf32>,
    %c0_74 = arith.constant 0 : index
    %c0_75 = arith.constant 0 : index
    %c0_76 = arith.constant 0 : index
    %c0_77 = arith.constant 0 : index
    %54 = vector.load %arg2[%c0_74, %c0_75, %c0_76, %c0_77] : memref<1x1x4x640xf32, #tpu.memory_space<vmem>>, vector<1x1x4x384xf32>
    %55 = vector.shape_cast %54 : vector<1x1x4x384xf32> to vector<4x384xf32>
    %c72 = arith.constant 72 : index
    %c0_78 = arith.constant 0 : index
    %56 = vector.load %arg6[%c72, %c0_78] : memref<108x384xf32, #tpu.memory_space<vmem>>, vector<4x384xf32>
    tpu.vector_store %arg6[%c72, %c0_78], %55 {strides = array<i32>} : memref<108x384xf32, #tpu.memory_space<vmem>>, vector<4x384xf32>,
    %c0_79 = arith.constant 0 : index
    %c0_80 = arith.constant 0 : index
    %c0_81 = arith.constant 0 : index
    %c4_82 = arith.constant 4 : index
    %57 = vector.load %arg2[%c0_79, %c0_80, %c0_81, %c4_82] : memref<1x1x4x640xf32, #tpu.memory_space<vmem>>, vector<1x1x4x384xf32>
    %58 = vector.shape_cast %57 : vector<1x1x4x384xf32> to vector<4x384xf32>
    %c76_83 = arith.constant 76 : index
    %c0_84 = arith.constant 0 : index
    %59 = vector.load %arg6[%c76_83, %c0_84] : memref<108x384xf32, #tpu.memory_space<vmem>>, vector<4x384xf32>
    tpu.vector_store %arg6[%c76_83, %c0_84], %58 {strides = array<i32>} : memref<108x384xf32, #tpu.memory_space<vmem>>, vector<4x384xf32>,
    %c0_85 = arith.constant 0 : index
    %c0_86 = arith.constant 0 : index
    %c0_87 = arith.constant 0 : index
    %c8_88 = arith.constant 8 : index
    %60 = vector.load %arg2[%c0_85, %c0_86, %c0_87, %c8_88] : memref<1x1x4x640xf32, #tpu.memory_space<vmem>>, vector<1x1x4x384xf32>
    %61 = vector.shape_cast %60 : vector<1x1x4x384xf32> to vector<4x384xf32>
    %c80 = arith.constant 80 : index
    %c0_89 = arith.constant 0 : index
    %62 = vector.load %arg6[%c80, %c0_89] : memref<108x384xf32, #tpu.memory_space<vmem>>, vector<4x384xf32>
    tpu.vector_store %arg6[%c80, %c0_89], %61 {strides = array<i32>} : memref<108x384xf32, #tpu.memory_space<vmem>>, vector<4x384xf32>,
    %c0_90 = arith.constant 0 : index
    %c0_91 = arith.constant 0 : index
    %c0_92 = arith.constant 0 : index
    %c96 = arith.constant 96 : index
    %63 = vector.load %arg2[%c0_90, %c0_91, %c0_92, %c96] : memref<1x1x4x640xf32, #tpu.memory_space<vmem>>, vector<1x1x4x384xf32>
    %64 = vector.shape_cast %63 : vector<1x1x4x384xf32> to vector<4x384xf32>
    %c84 = arith.constant 84 : index
    %c0_93 = arith.constant 0 : index
    %65 = vector.load %arg6[%c84, %c0_93] : memref<108x384xf32, #tpu.memory_space<vmem>>, vector<4x384xf32>
    tpu.vector_store %arg6[%c84, %c0_93], %64 {strides = array<i32>} : memref<108x384xf32, #tpu.memory_space<vmem>>, vector<4x384xf32>,
    %c0_94 = arith.constant 0 : index
    %c0_95 = arith.constant 0 : index
    %c0_96 = arith.constant 0 : index
    %c100_97 = arith.constant 100 : index
    %66 = vector.load %arg2[%c0_94, %c0_95, %c0_96, %c100_97] : memref<1x1x4x640xf32, #tpu.memory_space<vmem>>, vector<1x1x4x384xf32>
    %67 = vector.shape_cast %66 : vector<1x1x4x384xf32> to vector<4x384xf32>
    %c88 = arith.constant 88 : index
    %c0_98 = arith.constant 0 : index
    %68 = vector.load %arg6[%c88, %c0_98] : memref<108x384xf32, #tpu.memory_space<vmem>>, vector<4x384xf32>
    tpu.vector_store %arg6[%c88, %c0_98], %67 {strides = array<i32>} : memref<108x384xf32, #tpu.memory_space<vmem>>, vector<4x384xf32>,
    %c0_99 = arith.constant 0 : index
    %c0_100 = arith.constant 0 : index
    %c0_101 = arith.constant 0 : index
    %c104 = arith.constant 104 : index
    %69 = vector.load %arg2[%c0_99, %c0_100, %c0_101, %c104] : memref<1x1x4x640xf32, #tpu.memory_space<vmem>>, vector<1x1x4x384xf32>
    %70 = vector.shape_cast %69 : vector<1x1x4x384xf32> to vector<4x384xf32>
    %c92 = arith.constant 92 : index
    %c0_102 = arith.constant 0 : index
    %71 = vector.load %arg6[%c92, %c0_102] : memref<108x384xf32, #tpu.memory_space<vmem>>, vector<4x384xf32>
    tpu.vector_store %arg6[%c92, %c0_102], %70 {strides = array<i32>} : memref<108x384xf32, #tpu.memory_space<vmem>>, vector<4x384xf32>,
    %c0_103 = arith.constant 0 : index
    %c0_104 = arith.constant 0 : index
    %c0_105 = arith.constant 0 : index
    %c192 = arith.constant 192 : index
    %72 = vector.load %arg2[%c0_103, %c0_104, %c0_105, %c192] : memref<1x1x4x640xf32, #tpu.memory_space<vmem>>, vector<1x1x4x384xf32>
    %73 = vector.shape_cast %72 : vector<1x1x4x384xf32> to vector<4x384xf32>
    %c96_106 = arith.constant 96 : index
    %c0_107 = arith.constant 0 : index
    %74 = vector.load %arg6[%c96_106, %c0_107] : memref<108x384xf32, #tpu.memory_space<vmem>>, vector<4x384xf32>
    tpu.vector_store %arg6[%c96_106, %c0_107], %73 {strides = array<i32>} : memref<108x384xf32, #tpu.memory_space<vmem>>, vector<4x384xf32>,
    %c0_108 = arith.constant 0 : index
    %c0_109 = arith.constant 0 : index
    %c0_110 = arith.constant 0 : index
    %c196 = arith.constant 196 : index
    %75 = vector.load %arg2[%c0_108, %c0_109, %c0_110, %c196] : memref<1x1x4x640xf32, #tpu.memory_space<vmem>>, vector<1x1x4x384xf32>
    %76 = vector.shape_cast %75 : vector<1x1x4x384xf32> to vector<4x384xf32>
    %c100_111 = arith.constant 100 : index
    %c0_112 = arith.constant 0 : index
    %77 = vector.load %arg6[%c100_111, %c0_112] : memref<108x384xf32, #tpu.memory_space<vmem>>, vector<4x384xf32>
    tpu.vector_store %arg6[%c100_111, %c0_112], %76 {strides = array<i32>} : memref<108x384xf32, #tpu.memory_space<vmem>>, vector<4x384xf32>,
    %c0_113 = arith.constant 0 : index
    %c0_114 = arith.constant 0 : index
    %c0_115 = arith.constant 0 : index
    %c200 = arith.constant 200 : index
    %78 = vector.load %arg2[%c0_113, %c0_114, %c0_115, %c200] : memref<1x1x4x640xf32, #tpu.memory_space<vmem>>, vector<1x1x4x384xf32>
    %79 = vector.shape_cast %78 : vector<1x1x4x384xf32> to vector<4x384xf32>
    %c104_116 = arith.constant 104 : index
    %c0_117 = arith.constant 0 : index
    %80 = vector.load %arg6[%c104_116, %c0_117] : memref<108x384xf32, #tpu.memory_space<vmem>>, vector<4x384xf32>
    tpu.vector_store %arg6[%c104_116, %c0_117], %79 {strides = array<i32>} : memref<108x384xf32, #tpu.memory_space<vmem>>, vector<4x384xf32>,
    %c0_118 = arith.constant 0 : index
    %c0_119 = arith.constant 0 : index
    %81 = vector.load %arg3[%c0_118, %c0_119] : memref<8x108xf32, #tpu.memory_space<vmem>>, vector<8x108xf32>
    %c0_120 = arith.constant 0 : index
    %c0_121 = arith.constant 0 : index
    %82 = vector.load %arg6[%c0_120, %c0_121] : memref<108x384xf32, #tpu.memory_space<vmem>>, vector<108x384xf32>
    %cst = arith.constant dense<0.000000e+00> : vector<8x384xf32>
    %83 = tpu.matmul %81, %82, %cst {dimension_numbers = #tpu.dot_dimension_numbers<[1], [0], [0], [1], [0, 0, 1, 1], [], []>} : vector<8x108xf32>, vector<108x384xf32>, vector<8x384xf32> -> vector<8x384xf32>
    %c0_122 = arith.constant 0 : index
    %c0_123 = arith.constant 0 : index
    %84 = vector.load %arg4[%c0_122, %c0_123] : memref<8x1xf32, #tpu.memory_space<vmem>>, vector<8x1xf32>
    %85 = vector.broadcast %84 : vector<8x1xf32> to vector<8x384xf32>
    %86 = arith.addf %83, %85 : vector<8x384xf32>
    %c0_124 = arith.constant 0 : index
    %c0_125 = arith.constant 0 : index
    %c0_126 = arith.constant 0 : index
    %87 = vector.load %arg5[%c0_124, %c0_125, %c0_126] : memref<1x8x384xf32, #tpu.memory_space<vmem>>, vector<1x8x384xf32>
    %88 = vector.shape_cast %87 : vector<1x8x384xf32> to vector<8x384xf32>
    %89 = vector.shape_cast %86 : vector<8x384xf32> to vector<1x8x384xf32>
    tpu.vector_store %arg5[%c0_124, %c0_125, %c0_126], %89 {strides = array<i32>} : memref<1x8x384xf32, #tpu.memory_space<vmem>>, vector<1x8x384xf32>,
    return
  }
  func.func @transform_0(%arg0: i32, %arg1: i32) -> (i32, i32, i32, i32) {
    %c0_i32 = arith.constant 0 : i32
    %c0_i32_0 = arith.constant 0 : i32
    %c0_i32_1 = arith.constant 0 : i32
    return %arg0, %arg1, %c0_i32, %c0_i32_0 : i32, i32, i32, i32
  }
  func.func @transform_1(%arg0: i32, %arg1: i32) -> (i32, i32) {
    %c0_i32 = arith.constant 0 : i32
    %c0_i32_0 = arith.constant 0 : i32
    %c0_i32_1 = arith.constant 0 : i32
    return %c0_i32, %c0_i32_0 : i32, i32
  }
  func.func @transform_2(%arg0: i32, %arg1: i32) -> (i32, i32) {
    %c0_i32 = arith.constant 0 : i32
    %c0_i32_0 = arith.constant 0 : i32
    %c0_i32_1 = arith.constant 0 : i32
    return %c0_i32, %c0_i32_0 : i32, i32
  }
  func.func @transform_3(%arg0: i32, %arg1: i32) -> (i32, i32, i32) {
    %c0_i32 = arith.constant 0 : i32
    %c0_i32_0 = arith.constant 0 : i32
    return %arg0, %c0_i32, %arg1 : i32, i32, i32
  }
}

</mosaic_0001>

<llo_original>
// kernel: tpu_custom_call.1
$region0: #{tpu_custom_call.1}
  #allocation0 [shape = 'u32[]', space=smem, size = 0x4, offset = 0x4, fixed_abs, tag = 'smem constant byte address 0x4 - core index']
  #allocation1 [shape = 'u32[144,128]{1,0:T(1,128)}', space=vmem, size = 0x12000, scoped, tag = 'internal scratch']
  #allocation2 [shape = 'f32[108,384]{1,0:T(8,128)}', space=vmem, size = 0x2a000, scoped, tag = 'scratch operand']
  %s0 = inlined_call_operand.hbm [shape: f32[2,1,4,640], index: 0, kind: input, shape index: {}]
  %s1 = inlined_call_operand.vmem [shape: f32[8,108], index: 1, kind: input, shape index: {}]
  %s2 = inlined_call_operand.vmem [shape: f32[8,1], index: 2, kind: input, shape index: {}]
  %s3 = inlined_call_operand.hbm [shape: f32[2,8,384], index: 3, kind: output, shape index: {}]
  %s4 = sld [smem:[#allocation0]]
  $region49: #{tpu_custom_call.1} parent=0
    _
  %s6 = ssub.s32 1, %s4
  %s7 = scalar_select 0, %s6, %s4
  $region1: #{tpu_custom_call.1} parent=0
    #allocation3 [shape = 'u8[20480]{0}', space=vmem, size = 0x5000, scoped, tag = 'input window, operand 0']
    #allocation4 [shape = 's32[2]{0}', space=sflag, size = 0x8, scoped, tag = 'scoped memory for tpu_custom_call.1']
    #allocation5 [shape = 's32[2]{0}', space=sflag, size = 0x8, scoped, tag = 'scoped memory for tpu_custom_call.1']
    #allocation6 [shape = 'u8[24576]{0}', space=vmem, size = 0x6000, scoped, tag = 'output window, operand 0']
    %8 = vsyncpa [#allocation4], 0
    %s9 = scalar_lea.sflag [#allocation4], 1
    %10 = vsyncpa %s9, 0
    %11 = vsyncpa [#allocation5], 0
    %s12 = scalar_lea.sflag [#allocation5], 1
    %13 = vsyncpa %s12, 0
    loop: start=0, step=1, limit=4
    $region2: #{tpu_custom_call.1} parent=1 // loop_pre_header
      _
    $region3: #{tpu_custom_call.1} parent=1 // loop_header
      %s15 = sphi 0, %s19
      %p16 = scmp.ge.s32.totalorder %s15, 4
      %s22 = sphi 0, %s34
      %s23 = sphi 0, %s30
      %s24 = sphi 0, %s22
      %s25 = sphi 0, %s23
      %s26 = sphi 0, %s24
      %s27 = sphi 0, %s25
      %s39 = sphi 0, %s41
      %s42 = sphi 0, %s39
      %s43 = sphi 0, %s42
      %s59 = sphi 0, %s43
      %s63 = sphi 0, %s63
      %s65 = sphi 0, %s63
      %s66 = sphi 0, %s65
      %s80 = sphi 0, %s66
      %s84 = sphi 0, %s84
      %s86 = sphi 0, %s84
      %s87 = sphi 0, %s86
      %s101 = sphi 0, %s87
      %s109 = sphi 0, %s111
      %s112 = sphi 0, %s109
      %s113 = sphi 0, %s112
      %s129 = sphi 0, %s113
    $region4: #{tpu_custom_call.1} parent=1 // loop_header_branch
      %18 = sbr.rel (%p16) target = $region8
    $region5: #{tpu_custom_call.1} parent=1 // loop_body
      %s20 = ssub.s32 %s15, 1
      %s21 = ssub.s32 %s15, 2
      %s28 = sadd.s32 1, %s23
      %p29 = scmp.ge.s32.totalorder %s28, 1
      %s30 = scalar_select %p29, 0, %s28
      %s31 = sadd.s32 1, %s22
      %s32 = scalar_select %p29, %s31, %s22
      %p33 = scmp.ge.s32.totalorder %s32, 2
      %s34 = scalar_select %p33, 0, %s32
      %s35 = ssub.s32 %s22, %s34
      %s36 = ssub.s32 %s23, %s30
      %s37 = sor.u32 %s35, %s36
      %p38 = scmp.eq.s32.totalorder %s37, 0
      %s40 = sadd.s32 %s39, 1
      %s41 = scalar_select %p38, %s39, %s40
      %p44 = pneg %p38
      %p45 = scmp.eq.s32.totalorder %s15, 1
      %p46 = por %p44, %p45
      %p47 = scmp.ne.s32.totalorder %s39, %s42
      %p48 = scmp.eq.s32.totalorder %s15, 0
      %p49 = por %p47, %p48
      %p50 = scmp.ne.s32.totalorder %s39, %s42
      %p51 = scmp.eq.s32.totalorder %s20, 1
      %p52 = por %p50, %p51
      %p53 = scmp.ne.s32.totalorder %s42, %s43
      %p54 = scmp.eq.s32.totalorder %s20, 0
      %p55 = por %p53, %p54
      %p56 = scmp.ne.s32.totalorder %s42, %s43
      %p57 = scmp.eq.s32.totalorder %s21, 1
      %p58 = por %p56, %p57
      %p60 = scmp.ne.s32.totalorder %s43, %s59
      %p61 = scmp.eq.s32.totalorder %s21, 0
      %p62 = por %p60, %p61
      %s64 = sadd.s32 %s63, 1
      %p67 = scmp.eq.s32.totalorder %s15, 1
      %p68 = scmp.ne.s32.totalorder %s63, %s65
      %p69 = scmp.eq.s32.totalorder %s15, 0
      %p70 = por %p68, %p69
      %p71 = scmp.ne.s32.totalorder %s63, %s65
      %p72 = scmp.eq.s32.totalorder %s20, 1
      %p73 = por %p71, %p72
      %p74 = scmp.ne.s32.totalorder %s65, %s66
      %p75 = scmp.eq.s32.totalorder %s20, 0
      %p76 = por %p74, %p75
      %p77 = scmp.ne.s32.totalorder %s65, %s66
      %p78 = scmp.eq.s32.totalorder %s21, 1
      %p79 = por %p77, %p78
      %p81 = scmp.ne.s32.totalorder %s66, %s80
      %p82 = scmp.eq.s32.totalorder %s21, 0
      %p83 = por %p81, %p82
      %s85 = sadd.s32 %s84, 1
      %p88 = scmp.eq.s32.totalorder %s15, 1
      %p89 = scmp.ne.s32.totalorder %s84, %s86
      %p90 = scmp.eq.s32.totalorder %s15, 0
      %p91 = por %p89, %p90
      %p92 = scmp.ne.s32.totalorder %s84, %s86
      %p93 = scmp.eq.s32.totalorder %s20, 1
      %p94 = por %p92, %p93
      %p95 = scmp.ne.s32.totalorder %s86, %s87
      %p96 = scmp.eq.s32.totalorder %s20, 0
      %p97 = por %p95, %p96
      %p98 = scmp.ne.s32.totalorder %s86, %s87
      %p99 = scmp.eq.s32.totalorder %s21, 1
      %p100 = por %p98, %p99
      %p102 = scmp.ne.s32.totalorder %s87, %s101
      %p103 = scmp.eq.s32.totalorder %s21, 0
      %p104 = por %p102, %p103
      %s105 = ssub.s32 %s22, %s34
      %s106 = ssub.s32 %s23, %s30
      %s107 = sor.u32 %s105, %s106
      %p108 = scmp.eq.s32.totalorder %s107, 0
      %s110 = sadd.s32 %s109, 1
      %s111 = scalar_select %p108, %s109, %s110
      %p114 = pneg %p108
      %p115 = scmp.eq.s32.totalorder %s15, 1
      %p116 = por %p114, %p115
      %p117 = scmp.ne.s32.totalorder %s109, %s112
      %p118 = scmp.eq.s32.totalorder %s15, 0
      %p119 = por %p117, %p118
      %p120 = scmp.ne.s32.totalorder %s109, %s112
      %p121 = scmp.eq.s32.totalorder %s20, 1
      %p122 = por %p120, %p121
      %p123 = scmp.ne.s32.totalorder %s112, %s113
      %p124 = scmp.eq.s32.totalorder %s20, 0
      %p125 = por %p123, %p124
      %p126 = scmp.ne.s32.totalorder %s112, %s113
      %p127 = scmp.eq.s32.totalorder %s21, 1
      %p128 = por %p126, %p127
      %p130 = scmp.ne.s32.totalorder %s113, %s129
      %p131 = scmp.eq.s32.totalorder %s21, 0
      %p132 = por %p130, %p131
      %p133 = scmp.le.s32.totalorder 1, %s15
      %p134 = scmp.lt.s32.totalorder %s15, 3
      %p135 = pnand %p133, %p134
      %p136 = pneg %p135
      // Predicated region
      $region9: #{tpu_custom_call.1} parent=5 // pred_check
        _
      $region10: #{tpu_custom_call.1} parent=5 // pred_check_branch
        %138 = sbr.rel (%p135) target = $region12
      $region11: #{tpu_custom_call.1} parent=5 // pred_region
        %s139 = ssub.s32 %s15, 1
        // Predicated region
        $region13: #{tpu_custom_call.1} parent=11 // pred_check
          %p140 = pneg %p76
        $region14: #{tpu_custom_call.1} parent=11 // pred_check_branch
          %142 = sbr.rel (%p140) target = $region16
        $region15: #{tpu_custom_call.1} parent=11 // pred_region
          _
        $region16: #{tpu_custom_call.1} parent=11 // pred_fallthru
          _
        // Predicated region
        $region17: #{tpu_custom_call.1} parent=11 // pred_check
          %p143 = pneg %p97
        $region18: #{tpu_custom_call.1} parent=11 // pred_check_branch
          %145 = sbr.rel (%p143) target = $region20
        $region19: #{tpu_custom_call.1} parent=11 // pred_region
          _
        $region20: #{tpu_custom_call.1} parent=11 // pred_fallthru
          _
      $region12: #{tpu_custom_call.1} parent=5 // pred_fallthru
        _
      %p146 = scmp.lt.s32.totalorder %s15, 2
      // Predicated region
      $region21: #{tpu_custom_call.1} parent=5 // pred_check
        %p147 = pneg %p146
      $region22: #{tpu_custom_call.1} parent=5 // pred_check_branch
        %149 = sbr.rel (%p147) target = $region24
      $region23: #{tpu_custom_call.1} parent=5 // pred_region
        // Predicated region
        $region25: #{tpu_custom_call.1} parent=23 // pred_check
          %p150 = pneg %p49
        $region26: #{tpu_custom_call.1} parent=23 // pred_check_branch
          %152 = sbr.rel (%p150) target = $region28
        $region27: #{tpu_custom_call.1} parent=23 // pred_region
          %s153 = sand.u32 %s39, 1
          %s154 = scalar_lea.sflag [#allocation4], %s153
          %s155 = sand.u32 %s39, 1
          %s156 = smul.addr %s155, 20
          %s157 = scalar_lea.vmem [#allocation3], %s156
          %s159 = ssub.s32 320, 320
          %160 = vsyncadd %s154, %s159
          %s161 = smul.addr %s23, 5
          %s162 = smul.addr %s22, 5
          %s163 = sadd.s32 %s161, %s162
          %s164 = smul.addr %s163, 64
          %s165 = scalar_lea.hbm %s0, %s164
          %s167 = sshll.u32 %s157, 4
          %s168 = int_to_ptr.vmem [resolvable:$true] %s167
          %170 = dma.hbm_to_vmem [thread:$0]  %s165, 320, %s168, %s154
        $region28: #{tpu_custom_call.1} parent=23 // pred_fallthru
          _
      $region24: #{tpu_custom_call.1} parent=5 // pred_fallthru
        _
      %p171 = scmp.le.s32.totalorder 1, %s15
      %p172 = scmp.lt.s32.totalorder %s15, 3
      %p173 = pnand %p171, %p172
      %p174 = pneg %p173
      // Predicated region
      $region29: #{tpu_custom_call.1} parent=5 // pred_check
        _
      $region30: #{tpu_custom_call.1} parent=5 // pred_check_branch
        %176 = sbr.rel (%p173) target = $region32
      $region31: #{tpu_custom_call.1} parent=5 // pred_region
        %s177 = ssub.s32 %s15, 1
        %s178 = sand.u32 %s42, 1
        %s179 = scalar_lea.sflag [#allocation4], %s178
        %s180 = sand.u32 %s42, 1
        %s181 = smul.addr %s180, 20
        %s182 = scalar_lea.vmem [#allocation3], %s181
        // Predicated region
        $region33: #{tpu_custom_call.1} parent=31 // pred_check
          %p183 = pneg %p55
        $region34: #{tpu_custom_call.1} parent=31 // pred_check_branch
          %185 = sbr.rel (%p183) target = $region36
        $region35: #{tpu_custom_call.1} parent=31 // pred_region
          %186 = dma.done %s179, 320
        $region36: #{tpu_custom_call.1} parent=31 // pred_fallthru
          _
        %s187 = sand.u32 %s42, 1
        %s188 = scalar_lea.sflag [#allocation4], %s187
        %s189 = sand.u32 %s42, 1
        %s190 = smul.addr %s189, 20
        %s191 = scalar_lea.vmem [#allocation3], %s190
        %p192 = pneg %p55
        %p193 = pneg %p52
        %p194 = pneg %p76
        %p195 = pneg %p73
        %p196 = pneg %p97
        %p197 = pneg %p94
        %p198 = pneg %p125
        %p199 = pneg %p122
        %s200 = sand.u32 %s112, 1
        %s201 = scalar_lea.sflag [#allocation5], %s200
        %s202 = sand.u32 %s112, 1
        %s203 = smul.addr %s202, 24
        %s204 = scalar_lea.vmem [#allocation6], %s203
        %s205 = smul.u32 3, %s25
        %v206 = vld [vmem:[%s182] sm:$0xff]
        %v207 = vld [vmem:[%s182 + $0x8] sm:$0xff]
        %v210 = vcombine.high %v206, %v206
        %v211 = vcombine.high %v207, %v207
        %212 = vrot.lane.b32.xlu0 %v206, 53
        %v213 = vpop.permute.xlu0 %212
        %214 = vrot.lane.b32.xlu0 %v210, 53
        %v215 = vpop.permute.xlu0 %214
        %216 = vrot.lane.b32.xlu0 %v207, 53
        %v217 = vpop.permute.xlu0 %216
        %218 = vrot.lane.b32.xlu0 %v211, 53
        %v219 = vpop.permute.xlu0 %218
        %vm220 = vcmask 433152
        %v221 = vsel %vm220, %v213, %v215
        %v222 = vsel %vm220, %v215, %v217
        %v223 = vsel %vm220, %v217, %v219
        %227 = vst [vmem:[#allocation2] sm:$0xf] %v221
        %228 = vst [vmem:[#allocation2 + $0x8] sm:$0xf] %v222
        %229 = vst [vmem:[#allocation2 + $0x10] sm:$0xf] %v223
        %v230 = vld [vmem:[%s182] sm:$0xff]
        %v231 = vld [vmem:[%s182 + $0x8] sm:$0xff]
        %v234 = vcombine.low %v230, %v230
        %v235 = vcombine.low %v231, %v231
        %236 = vrot.lane.b32.xlu0 %v234, 52
        %v237 = vpop.permute.xlu0 %236
        %238 = vrot.lane.b32.xlu0 %v230, 52
        %v239 = vpop.permute.xlu0 %238
        %240 = vrot.lane.b32.xlu0 %v235, 52
        %v241 = vpop.permute.xlu0 %240
        %242 = vrot.lane.b32.xlu0 %v231, 52
        %v243 = vpop.permute.xlu0 %242
        %vm244 = vcmask 424960
        %v245 = vsel %vm244, %v237, %v239
        %v246 = vsel %vm244, %v239, %v241
        %v247 = vsel %vm244, %v241, %v243
        %251 = vst [vmem:[#allocation2] sm:$0xf0] %v245
        %252 = vst [vmem:[#allocation2 + $0x8] sm:$0xf0] %v246
        %253 = vst [vmem:[#allocation2 + $0x10] sm:$0xf0] %v247
        %v254 = vld [vmem:[%s182] sm:$0xff]
        %v255 = vld [vmem:[%s182 + $0x8] sm:$0xff]
        %v258 = vcombine.high %v254, %v254
        %v259 = vcombine.high %v255, %v255
        %260 = vrot.lane.b32.xlu0 %v254, 51
        %v261 = vpop.permute.xlu0 %260
        %262 = vrot.lane.b32.xlu0 %v258, 51
        %v263 = vpop.permute.xlu0 %262
        %264 = vrot.lane.b32.xlu0 %v255, 51
        %v265 = vpop.permute.xlu0 %264
        %266 = vrot.lane.b32.xlu0 %v259, 51
        %v267 = vpop.permute.xlu0 %266
        %vm268 = vcmask 416768
        %v269 = vsel %vm268, %v261, %v263
        %v270 = vsel %vm268, %v263, %v265
        %v271 = vsel %vm268, %v265, %v267
        %275 = vst [vmem:[#allocation2 + $0x18] sm:$0xf] %v269
        %276 = vst [vmem:[#allocation2 + $0x20] sm:$0xf] %v270
        %277 = vst [vmem:[#allocation2 + $0x28] sm:$0xf] %v271
        %v278 = vld [vmem:[%s182] sm:$0xff]
        %v279 = vld [vmem:[%s182 + $0x8] sm:$0xff]
        %v282 = vcombine.low %v278, %v278
        %v283 = vcombine.low %v279, %v279
        %284 = vrot.lane.b32.xlu0 %v282, 29
        %v285 = vpop.permute.xlu0 %284
        %286 = vrot.lane.b32.xlu0 %v278, 29
        %v287 = vpop.permute.xlu0 %286
        %288 = vrot.lane.b32.xlu0 %v283, 29
        %v289 = vpop.permute.xlu0 %288
        %290 = vrot.lane.b32.xlu0 %v279, 29
        %v291 = vpop.permute.xlu0 %290
        %vm292 = vcmask 236544
        %v293 = vsel %vm292, %v285, %v287
        %v294 = vsel %vm292, %v287, %v289
        %v295 = vsel %vm292, %v289, %v291
        %299 = vst [vmem:[#allocation2 + $0x18] sm:$0xf0] %v293
        %300 = vst [vmem:[#allocation2 + $0x20] sm:$0xf0] %v294
        %301 = vst [vmem:[#allocation2 + $0x28] sm:$0xf0] %v295
        %v302 = vld [vmem:[%s182] sm:$0xff]
        %v303 = vld [vmem:[%s182 + $0x8] sm:$0xff]
        %v306 = vcombine.high %v302, %v302
        %v307 = vcombine.high %v303, %v303
        %308 = vrot.lane.b32.xlu0 %v302, 28
        %v309 = vpop.permute.xlu0 %308
        %310 = vrot.lane.b32.xlu0 %v306, 28
        %v311 = vpop.permute.xlu0 %310
        %312 = vrot.lane.b32.xlu0 %v303, 28
        %v313 = vpop.permute.xlu0 %312
        %314 = vrot.lane.b32.xlu0 %v307, 28
        %v315 = vpop.permute.xlu0 %314
        %vm316 = vcmask 228352
        %v317 = vsel %vm316, %v309, %v311
        %v318 = vsel %vm316, %v311, %v313
        %v319 = vsel %vm316, %v313, %v315
        %323 = vst [vmem:[#allocation2 + $0x30] sm:$0xf] %v317
        %324 = vst [vmem:[#allocation2 + $0x38] sm:$0xf] %v318
        %325 = vst [vmem:[#allocation2 + $0x40] sm:$0xf] %v319
        %v326 = vld [vmem:[%s182] sm:$0xff]
        %v327 = vld [vmem:[%s182 + $0x8] sm:$0xff]
        %v330 = vcombine.low %v326, %v326
        %v331 = vcombine.low %v327, %v327
        %332 = vrot.lane.b32.xlu0 %v330, 27
        %v333 = vpop.permute.xlu0 %332
        %334 = vrot.lane.b32.xlu0 %v326, 27
        %v335 = vpop.permute.xlu0 %334
        %336 = vrot.lane.b32.xlu0 %v331, 27
        %v337 = vpop.permute.xlu0 %336
        %338 = vrot.lane.b32.xlu0 %v327, 27
        %v339 = vpop.permute.xlu0 %338
        %vm340 = vcmask 220160
        %v341 = vsel %vm340, %v333, %v335
        %v342 = vsel %vm340, %v335, %v337
        %v343 = vsel %vm340, %v337, %v339
        %347 = vst [vmem:[#allocation2 + $0x30] sm:$0xf0] %v341
        %348 = vst [vmem:[#allocation2 + $0x38] sm:$0xf0] %v342
        %349 = vst [vmem:[#allocation2 + $0x40] sm:$0xf0] %v343
        %v350 = vld [vmem:[%s182] sm:$0xff]
        %v351 = vld [vmem:[%s182 + $0x8] sm:$0xff]
        %v354 = vcombine.high %v350, %v350
        %v355 = vcombine.high %v351, %v351
        %356 = vrot.lane.b32.xlu0 %v350, 5
        %v357 = vpop.permute.xlu0 %356
        %358 = vrot.lane.b32.xlu0 %v354, 5
        %v359 = vpop.permute.xlu0 %358
        %360 = vrot.lane.b32.xlu0 %v351, 5
        %v361 = vpop.permute.xlu0 %360
        %362 = vrot.lane.b32.xlu0 %v355, 5
        %v363 = vpop.permute.xlu0 %362
        %vm364 = vcmask 39936
        %v365 = vsel %vm364, %v357, %v359
        %v366 = vsel %vm364, %v359, %v361
        %v367 = vsel %vm364, %v361, %v363
        %371 = vst [vmem:[#allocation2 + $0x48] sm:$0xf] %v365
        %372 = vst [vmem:[#allocation2 + $0x50] sm:$0xf] %v366
        %373 = vst [vmem:[#allocation2 + $0x58] sm:$0xf] %v367
        %v374 = vld [vmem:[%s182] sm:$0xff]
        %v375 = vld [vmem:[%s182 + $0x8] sm:$0xff]
        %v378 = vcombine.low %v374, %v374
        %v379 = vcombine.low %v375, %v375
        %380 = vrot.lane.b32.xlu0 %v378, 4
        %v381 = vpop.permute.xlu0 %380
        %382 = vrot.lane.b32.xlu0 %v374, 4
        %v383 = vpop.permute.xlu0 %382
        %384 = vrot.lane.b32.xlu0 %v379, 4
        %v385 = vpop.permute.xlu0 %384
        %386 = vrot.lane.b32.xlu0 %v375, 4
        %v387 = vpop.permute.xlu0 %386
        %vm388 = vcmask 31744
        %v389 = vsel %vm388, %v381, %v383
        %v390 = vsel %vm388, %v383, %v385
        %v391 = vsel %vm388, %v385, %v387
        %395 = vst [vmem:[#allocation2 + $0x48] sm:$0xf0] %v389
        %396 = vst [vmem:[#allocation2 + $0x50] sm:$0xf0] %v390
        %397 = vst [vmem:[#allocation2 + $0x58] sm:$0xf0] %v391
        %v398 = vld [vmem:[%s182] sm:$0xff]
        %v399 = vld [vmem:[%s182 + $0x8] sm:$0xff]
        %v402 = vcombine.high %v398, %v398
        %v403 = vcombine.high %v399, %v399
        %404 = vrot.lane.b32.xlu0 %v398, 3
        %v405 = vpop.permute.xlu0 %404
        %406 = vrot.lane.b32.xlu0 %v402, 3
        %v407 = vpop.permute.xlu0 %406
        %408 = vrot.lane.b32.xlu0 %v399, 3
        %v409 = vpop.permute.xlu0 %408
        %410 = vrot.lane.b32.xlu0 %v403, 3
        %v411 = vpop.permute.xlu0 %410
        %vm412 = vcmask 23552
        %v413 = vsel %vm412, %v405, %v407
        %v414 = vsel %vm412, %v407, %v409
        %v415 = vsel %vm412, %v409, %v411
        %419 = vst [vmem:[#allocation2 + $0x60] sm:$0xf] %v413
        %420 = vst [vmem:[#allocation2 + $0x68] sm:$0xf] %v414
        %421 = vst [vmem:[#allocation2 + $0x70] sm:$0xf] %v415
        %v422 = vld [vmem:[%s182] sm:$0xff]
        %v423 = vld [vmem:[%s182 + $0x8] sm:$0xff]
        %v426 = vcombine.low %v422, %v422
        %v427 = vcombine.low %v423, %v423
        %428 = vrot.lane.b32.xlu0 %v426, 78
        %v429 = vpop.permute.xlu0 %428
        %430 = vrot.lane.b32.xlu0 %v422, 78
        %v431 = vpop.permute.xlu0 %430
        %432 = vrot.lane.b32.xlu0 %v427, 78
        %v433 = vpop.permute.xlu0 %432
        %434 = vrot.lane.b32.xlu0 %v423, 78
        %v435 = vpop.permute.xlu0 %434
        %vm436 = vcmask 637952
        %v437 = vsel %vm436, %v429, %v431
        %v438 = vsel %vm436, %v431, %v433
        %v439 = vsel %vm436, %v433, %v435
        %443 = vst [vmem:[#allocation2 + $0x60] sm:$0xf0] %v437
        %444 = vst [vmem:[#allocation2 + $0x68] sm:$0xf0] %v438
        %445 = vst [vmem:[#allocation2 + $0x70] sm:$0xf0] %v439
        %v446 = vld [vmem:[%s182] sm:$0xff]
        %v447 = vld [vmem:[%s182 + $0x8] sm:$0xff]
        %v450 = vcombine.high %v446, %v446
        %v451 = vcombine.high %v447, %v447
        %452 = vrot.lane.b32.xlu0 %v446, 76
        %v453 = vpop.permute.xlu0 %452
        %454 = vrot.lane.b32.xlu0 %v450, 76
        %v455 = vpop.permute.xlu0 %454
        %456 = vrot.lane.b32.xlu0 %v447, 76
        %v457 = vpop.permute.xlu0 %456
        %458 = vrot.lane.b32.xlu0 %v451, 76
        %v459 = vpop.permute.xlu0 %458
        %vm460 = vcmask 621568
        %v461 = vsel %vm460, %v453, %v455
        %v462 = vsel %vm460, %v455, %v457
        %v463 = vsel %vm460, %v457, %v459
        %467 = vst [vmem:[#allocation2 + $0x78] sm:$0xf] %v461
        %468 = vst [vmem:[#allocation2 + $0x80] sm:$0xf] %v462
        %469 = vst [vmem:[#allocation2 + $0x88] sm:$0xf] %v463
        %v470 = vld [vmem:[%s182] sm:$0xff]
        %v471 = vld [vmem:[%s182 + $0x8] sm:$0xff]
        %v474 = vcombine.low %v470, %v470
        %v475 = vcombine.low %v471, %v471
        %476 = vrot.lane.b32.xlu0 %v474, 74
        %v477 = vpop.permute.xlu0 %476
        %478 = vrot.lane.b32.xlu0 %v470, 74
        %v479 = vpop.permute.xlu0 %478
        %480 = vrot.lane.b32.xlu0 %v475, 74
        %v481 = vpop.permute.xlu0 %480
        %482 = vrot.lane.b32.xlu0 %v471, 74
        %v483 = vpop.permute.xlu0 %482
        %vm484 = vcmask 605184
        %v485 = vsel %vm484, %v477, %v479
        %v486 = vsel %vm484, %v479, %v481
        %v487 = vsel %vm484, %v481, %v483
        %491 = vst [vmem:[#allocation2 + $0x78] sm:$0xf0] %v485
        %492 = vst [vmem:[#allocation2 + $0x80] sm:$0xf0] %v486
        %493 = vst [vmem:[#allocation2 + $0x88] sm:$0xf0] %v487
        %v494 = vld [vmem:[%s182] sm:$0xff]
        %v495 = vld [vmem:[%s182 + $0x8] sm:$0xff]
        %v498 = vcombine.high %v494, %v494
        %v499 = vcombine.high %v495, %v495
        %500 = vrot.lane.b32.xlu0 %v494, 30
        %v501 = vpop.permute.xlu0 %500
        %502 = vrot.lane.b32.xlu0 %v498, 30
        %v503 = vpop.permute.xlu0 %502
        %504 = vrot.lane.b32.xlu0 %v495, 30
        %v505 = vpop.permute.xlu0 %504
        %506 = vrot.lane.b32.xlu0 %v499, 30
        %v507 = vpop.permute.xlu0 %506
        %vm508 = vcmask 244736
        %v509 = vsel %vm508, %v501, %v503
        %v510 = vsel %vm508, %v503, %v505
        %v511 = vsel %vm508, %v505, %v507
        %515 = vst [vmem:[#allocation2 + $0x90] sm:$0xf] %v509
        %516 = vst [vmem:[#allocation2 + $0x98] sm:$0xf] %v510
        %517 = vst [vmem:[#allocation2 + $0xa0] sm:$0xf] %v511
        %v518 = vld [vmem:[%s182] sm:$0xff]
        %v519 = vld [vmem:[%s182 + $0x8] sm:$0xff]
        %v522 = vcombine.low %v518, %v518
        %v523 = vcombine.low %v519, %v519
        %524 = vrot.lane.b32.xlu0 %v522, 28
        %v525 = vpop.permute.xlu0 %524
        %526 = vrot.lane.b32.xlu0 %v518, 28
        %v527 = vpop.permute.xlu0 %526
        %528 = vrot.lane.b32.xlu0 %v523, 28
        %v529 = vpop.permute.xlu0 %528
        %530 = vrot.lane.b32.xlu0 %v519, 28
        %v531 = vpop.permute.xlu0 %530
        %v532 = vsel %vm316, %v525, %v527
        %v533 = vsel %vm316, %v527, %v529
        %v534 = vsel %vm316, %v529, %v531
        %538 = vst [vmem:[#allocation2 + $0x90] sm:$0xf0] %v532
        %539 = vst [vmem:[#allocation2 + $0x98] sm:$0xf0] %v533
        %540 = vst [vmem:[#allocation2 + $0xa0] sm:$0xf0] %v534
        %v541 = vld [vmem:[%s182] sm:$0xff]
        %v542 = vld [vmem:[%s182 + $0x8] sm:$0xff]
        %v545 = vcombine.high %v541, %v541
        %v546 = vcombine.high %v542, %v542
        %547 = vrot.lane.b32.xlu0 %v541, 26
        %v548 = vpop.permute.xlu0 %547
        %549 = vrot.lane.b32.xlu0 %v545, 26
        %v550 = vpop.permute.xlu0 %549
        %551 = vrot.lane.b32.xlu0 %v542, 26
        %v552 = vpop.permute.xlu0 %551
        %553 = vrot.lane.b32.xlu0 %v546, 26
        %v554 = vpop.permute.xlu0 %553
        %vm555 = vcmask 211968
        %v556 = vsel %vm555, %v548, %v550
        %v557 = vsel %vm555, %v550, %v552
        %v558 = vsel %vm555, %v552, %v554
        %562 = vst [vmem:[#allocation2 + $0xa8] sm:$0xf] %v556
        %563 = vst [vmem:[#allocation2 + $0xb0] sm:$0xf] %v557
        %564 = vst [vmem:[#allocation2 + $0xb8] sm:$0xf] %v558
        %v565 = vld [vmem:[%s182 + $0x4] sm:$0xff]
        %v566 = vld [vmem:[%s182 + $0xc] sm:$0xff]
        %v569 = vcombine.low %v565, %v565
        %v570 = vcombine.low %v566, %v566
        %571 = vrot.lane.b32.xlu0 %v569, 110
        %v572 = vpop.permute.xlu0 %571
        %573 = vrot.lane.b32.xlu0 %v565, 110
        %v574 = vpop.permute.xlu0 %573
        %575 = vrot.lane.b32.xlu0 %v570, 110
        %v576 = vpop.permute.xlu0 %575
        %577 = vrot.lane.b32.xlu0 %v566, 110
        %v578 = vpop.permute.xlu0 %577
        %vm579 = vcmask 900096
        %v580 = vsel %vm579, %v572, %v574
        %v581 = vsel %vm579, %v574, %v576
        %v582 = vsel %vm579, %v576, %v578
        %586 = vst [vmem:[#allocation2 + $0xa8] sm:$0xf0] %v580
        %587 = vst [vmem:[#allocation2 + $0xb0] sm:$0xf0] %v581
        %588 = vst [vmem:[#allocation2 + $0xb8] sm:$0xf0] %v582
        %v589 = vld [vmem:[%s182 + $0x4] sm:$0xff]
        %v590 = vld [vmem:[%s182 + $0xc] sm:$0xff]
        %v593 = vcombine.high %v589, %v589
        %v594 = vcombine.high %v590, %v590
        %595 = vrot.lane.b32.xlu0 %v589, 108
        %v596 = vpop.permute.xlu0 %595
        %597 = vrot.lane.b32.xlu0 %v593, 108
        %v598 = vpop.permute.xlu0 %597
        %599 = vrot.lane.b32.xlu0 %v590, 108
        %v600 = vpop.permute.xlu0 %599
        %601 = vrot.lane.b32.xlu0 %v594, 108
        %v602 = vpop.permute.xlu0 %601
        %vm603 = vcmask 883712
        %v604 = vsel %vm603, %v596, %v598
        %v605 = vsel %vm603, %v598, %v600
        %v606 = vsel %vm603, %v600, %v602
        %610 = vst [vmem:[#allocation2 + $0xc0] sm:$0xf] %v604
        %611 = vst [vmem:[#allocation2 + $0xc8] sm:$0xf] %v605
        %612 = vst [vmem:[#allocation2 + $0xd0] sm:$0xf] %v606
        %v613 = vld [vmem:[%s182 + $0x4] sm:$0xff]
        %v614 = vld [vmem:[%s182 + $0xc] sm:$0xff]
        %v617 = vcombine.low %v613, %v613
        %v618 = vcombine.low %v614, %v614
        %619 = vrot.lane.b32.xlu0 %v617, 106
        %v620 = vpop.permute.xlu0 %619
        %621 = vrot.lane.b32.xlu0 %v613, 106
        %v622 = vpop.permute.xlu0 %621
        %623 = vrot.lane.b32.xlu0 %v618, 106
        %v624 = vpop.permute.xlu0 %623
        %625 = vrot.lane.b32.xlu0 %v614, 106
        %v626 = vpop.permute.xlu0 %625
        %vm627 = vcmask 867328
        %v628 = vsel %vm627, %v620, %v622
        %v629 = vsel %vm627, %v622, %v624
        %v630 = vsel %vm627, %v624, %v626
        %634 = vst [vmem:[#allocation2 + $0xc0] sm:$0xf0] %v628
        %635 = vst [vmem:[#allocation2 + $0xc8] sm:$0xf0] %v629
        %636 = vst [vmem:[#allocation2 + $0xd0] sm:$0xf0] %v630
        %v637 = vld [vmem:[%s182] sm:$0xff]
        %v638 = vld [vmem:[%s182 + $0x8] sm:$0xf]
        %v640 = vcombine.high %v637, %v637
        %642 = vst [vmem:[#allocation2 + $0xd8] sm:$0xf] %v637
        %643 = vst [vmem:[#allocation2 + $0xe0] sm:$0xf] %v640
        %644 = vst [vmem:[#allocation2 + $0xe8] sm:$0xf] %v638
        %v645 = vld [vmem:[%s182] sm:$0xff]
        %v646 = vld [vmem:[%s182 + $0x8] sm:$0xff]
        %v649 = vcombine.low %v645, %v645
        %v650 = vcombine.low %v646, %v646
        %651 = vrot.lane.b32.xlu0 %v649, 124
        %v652 = vpop.permute.xlu0 %651
        %653 = vrot.lane.b32.xlu0 %v645, 124
        %v654 = vpop.permute.xlu0 %653
        %655 = vrot.lane.b32.xlu0 %v650, 124
        %v656 = vpop.permute.xlu0 %655
        %657 = vrot.lane.b32.xlu0 %v646, 124
        %v658 = vpop.permute.xlu0 %657
        %vm659 = vcmask 1014784
        %v660 = vsel %vm659, %v652, %v654
        %v661 = vsel %vm659, %v654, %v656
        %v662 = vsel %vm659, %v656, %v658
        %666 = vst [vmem:[#allocation2 + $0xd8] sm:$0xf0] %v660
        %667 = vst [vmem:[#allocation2 + $0xe0] sm:$0xf0] %v661
        %668 = vst [vmem:[#allocation2 + $0xe8] sm:$0xf0] %v662
        %v669 = vld [vmem:[%s182] sm:$0xff]
        %v670 = vld [vmem:[%s182 + $0x8] sm:$0xff]
        %v673 = vcombine.high %v669, %v669
        %v674 = vcombine.high %v670, %v670
        %675 = vrot.lane.b32.xlu0 %v669, 120
        %v676 = vpop.permute.xlu0 %675
        %677 = vrot.lane.b32.xlu0 %v673, 120
        %v678 = vpop.permute.xlu0 %677
        %679 = vrot.lane.b32.xlu0 %v670, 120
        %v680 = vpop.permute.xlu0 %679
        %681 = vrot.lane.b32.xlu0 %v674, 120
        %v682 = vpop.permute.xlu0 %681
        %vm683 = vcmask 982016
        %v684 = vsel %vm683, %v676, %v678
        %v685 = vsel %vm683, %v678, %v680
        %v686 = vsel %vm683, %v680, %v682
        %690 = vst [vmem:[#allocation2 + $0xf0] sm:$0xf] %v684
        %691 = vst [vmem:[#allocation2 + $0xf8] sm:$0xf] %v685
        %692 = vst [vmem:[#allocation2 + $0x100] sm:$0xf] %v686
        %v693 = vld [vmem:[%s182] sm:$0xff]
        %v694 = vld [vmem:[%s182 + $0x8] sm:$0xff]
        %v697 = vcombine.low %v693, %v693
        %v698 = vcombine.low %v694, %v694
        %699 = vrot.lane.b32.xlu0 %v697, 32
        %v700 = vpop.permute.xlu0 %699
        %701 = vrot.lane.b32.xlu0 %v693, 32
        %v702 = vpop.permute.xlu0 %701
        %703 = vrot.lane.b32.xlu0 %v698, 32
        %v704 = vpop.permute.xlu0 %703
        %705 = vrot.lane.b32.xlu0 %v694, 32
        %v706 = vpop.permute.xlu0 %705
        %vm707 = vcmask 261120
        %v708 = vsel %vm707, %v700, %v702
        %v709 = vsel %vm707, %v702, %v704
        %v710 = vsel %vm707, %v704, %v706
        %714 = vst [vmem:[#allocation2 + $0xf0] sm:$0xf0] %v708
        %715 = vst [vmem:[#allocation2 + $0xf8] sm:$0xf0] %v709
        %716 = vst [vmem:[#allocation2 + $0x100] sm:$0xf0] %v710
        %v717 = vld [vmem:[%s182] sm:$0xff]
        %v718 = vld [vmem:[%s182 + $0x8] sm:$0xff]
        %v721 = vcombine.high %v717, %v717
        %v722 = vcombine.high %v718, %v718
        %723 = vrot.lane.b32.xlu0 %v717, 28
        %v724 = vpop.permute.xlu0 %723
        %725 = vrot.lane.b32.xlu0 %v721, 28
        %v726 = vpop.permute.xlu0 %725
        %727 = vrot.lane.b32.xlu0 %v718, 28
        %v728 = vpop.permute.xlu0 %727
        %729 = vrot.lane.b32.xlu0 %v722, 28
        %v730 = vpop.permute.xlu0 %729
        %v731 = vsel %vm316, %v724, %v726
        %v732 = vsel %vm316, %v726, %v728
        %v733 = vsel %vm316, %v728, %v730
        %737 = vst [vmem:[#allocation2 + $0x108] sm:$0xf] %v731
        %738 = vst [vmem:[#allocation2 + $0x110] sm:$0xf] %v732
        %739 = vst [vmem:[#allocation2 + $0x118] sm:$0xf] %v733
        %v740 = vld [vmem:[%s182] sm:$0xff]
        %v741 = vld [vmem:[%s182 + $0x8] sm:$0xff]
        %v744 = vcombine.low %v740, %v740
        %v745 = vcombine.low %v741, %v741
        %746 = vrot.lane.b32.xlu0 %v744, 24
        %v747 = vpop.permute.xlu0 %746
        %748 = vrot.lane.b32.xlu0 %v740, 24
        %v749 = vpop.permute.xlu0 %748
        %750 = vrot.lane.b32.xlu0 %v745, 24
        %v751 = vpop.permute.xlu0 %750
        %752 = vrot.lane.b32.xlu0 %v741, 24
        %v753 = vpop.permute.xlu0 %752
        %vm754 = vcmask 195584
        %v755 = vsel %vm754, %v747, %v749
        %v756 = vsel %vm754, %v749, %v751
        %v757 = vsel %vm754, %v751, %v753
        %761 = vst [vmem:[#allocation2 + $0x108] sm:$0xf0] %v755
        %762 = vst [vmem:[#allocation2 + $0x110] sm:$0xf0] %v756
        %763 = vst [vmem:[#allocation2 + $0x118] sm:$0xf0] %v757
        %v764 = vld [vmem:[%s182 + $0x4] sm:$0xff]
        %v765 = vld [vmem:[%s182 + $0xc] sm:$0xff]
        %v768 = vcombine.high %v764, %v764
        %v769 = vcombine.high %v765, %v765
        %770 = vrot.lane.b32.xlu0 %v764, 64
        %v771 = vpop.permute.xlu0 %770
        %772 = vrot.lane.b32.xlu0 %v768, 64
        %v773 = vpop.permute.xlu0 %772
        %774 = vrot.lane.b32.xlu0 %v765, 64
        %v775 = vpop.permute.xlu0 %774
        %776 = vrot.lane.b32.xlu0 %v769, 64
        %v777 = vpop.permute.xlu0 %776
        %vm778 = vcmask 523264
        %v779 = vsel %vm778, %v771, %v773
        %v780 = vsel %vm778, %v773, %v775
        %v781 = vsel %vm778, %v775, %v777
        %785 = vst [vmem:[#allocation2 + $0x120] sm:$0xf] %v779
        %786 = vst [vmem:[#allocation2 + $0x128] sm:$0xf] %v780
        %787 = vst [vmem:[#allocation2 + $0x130] sm:$0xf] %v781
        %v788 = vld [vmem:[%s182 + $0x4] sm:$0xff]
        %v789 = vld [vmem:[%s182 + $0xc] sm:$0xff]
        %v792 = vcombine.low %v788, %v788
        %v793 = vcombine.low %v789, %v789
        %794 = vrot.lane.b32.xlu0 %v792, 60
        %v795 = vpop.permute.xlu0 %794
        %796 = vrot.lane.b32.xlu0 %v788, 60
        %v797 = vpop.permute.xlu0 %796
        %798 = vrot.lane.b32.xlu0 %v793, 60
        %v799 = vpop.permute.xlu0 %798
        %800 = vrot.lane.b32.xlu0 %v789, 60
        %v801 = vpop.permute.xlu0 %800
        %vm802 = vcmask 490496
        %v803 = vsel %vm802, %v795, %v797
        %v804 = vsel %vm802, %v797, %v799
        %v805 = vsel %vm802, %v799, %v801
        %809 = vst [vmem:[#allocation2 + $0x120] sm:$0xf0] %v803
        %810 = vst [vmem:[#allocation2 + $0x128] sm:$0xf0] %v804
        %811 = vst [vmem:[#allocation2 + $0x130] sm:$0xf0] %v805
        %v812 = vld [vmem:[%s182 + $0x4] sm:$0xff]
        %v813 = vld [vmem:[%s182 + $0xc] sm:$0xff]
        %v816 = vcombine.high %v812, %v812
        %v817 = vcombine.high %v813, %v813
        %818 = vrot.lane.b32.xlu0 %v812, 56
        %v819 = vpop.permute.xlu0 %818
        %820 = vrot.lane.b32.xlu0 %v816, 56
        %v821 = vpop.permute.xlu0 %820
        %822 = vrot.lane.b32.xlu0 %v813, 56
        %v823 = vpop.permute.xlu0 %822
        %824 = vrot.lane.b32.xlu0 %v817, 56
        %v825 = vpop.permute.xlu0 %824
        %vm826 = vcmask 457728
        %v827 = vsel %vm826, %v819, %v821
        %v828 = vsel %vm826, %v821, %v823
        %v829 = vsel %vm826, %v823, %v825
        %833 = vst [vmem:[#allocation2 + $0x138] sm:$0xf] %v827
        %834 = vst [vmem:[#allocation2 + $0x140] sm:$0xf] %v828
        %835 = vst [vmem:[#allocation2 + $0x148] sm:$0xf] %v829
        %v836 = vld [vmem:[%s1] sm:$0xff]
        %v837 = vld [vmem:[#allocation2] sm:$0xff]
        %v838 = vld [vmem:[#allocation2 + $0x8] sm:$0xff]
        %v839 = vld [vmem:[#allocation2 + $0x10] sm:$0xff]
        %v840 = vld [vmem:[#allocation2 + $0x18] sm:$0xff]
        %v841 = vld [vmem:[#allocation2 + $0x20] sm:$0xff]
        %v842 = vld [vmem:[#allocation2 + $0x28] sm:$0xff]
        %v843 = vld [vmem:[#allocation2 + $0x30] sm:$0xff]
        %v844 = vld [vmem:[#allocation2 + $0x38] sm:$0xff]
        %v845 = vld [vmem:[#allocation2 + $0x40] sm:$0xff]
        %v846 = vld [vmem:[#allocation2 + $0x48] sm:$0xff]
        %v847 = vld [vmem:[#allocation2 + $0x50] sm:$0xff]
        %v848 = vld [vmem:[#allocation2 + $0x58] sm:$0xff]
        %v849 = vld [vmem:[#allocation2 + $0x60] sm:$0xff]
        %v850 = vld [vmem:[#allocation2 + $0x68] sm:$0xff]
        %v851 = vld [vmem:[#allocation2 + $0x70] sm:$0xff]
        %v852 = vld [vmem:[#allocation2 + $0x78] sm:$0xff]
        %v853 = vld [vmem:[#allocation2 + $0x80] sm:$0xff]
        %v854 = vld [vmem:[#allocation2 + $0x88] sm:$0xff]
        %v855 = vld [vmem:[#allocation2 + $0x90] sm:$0xff]
        %v856 = vld [vmem:[#allocation2 + $0x98] sm:$0xff]
        %v857 = vld [vmem:[#allocation2 + $0xa0] sm:$0xff]
        %v858 = vld [vmem:[#allocation2 + $0xa8] sm:$0xff]
        %v859 = vld [vmem:[#allocation2 + $0xb0] sm:$0xff]
        %v860 = vld [vmem:[#allocation2 + $0xb8] sm:$0xff]
        %v861 = vld [vmem:[#allocation2 + $0xc0] sm:$0xff]
        %v862 = vld [vmem:[#allocation2 + $0xc8] sm:$0xff]
        %v863 = vld [vmem:[#allocation2 + $0xd0] sm:$0xff]
        %v864 = vld [vmem:[#allocation2 + $0xd8] sm:$0xff]
        %v865 = vld [vmem:[#allocation2 + $0xe0] sm:$0xff]
        %v866 = vld [vmem:[#allocation2 + $0xe8] sm:$0xff]
        %v867 = vld [vmem:[#allocation2 + $0xf0] sm:$0xff]
        %v868 = vld [vmem:[#allocation2 + $0xf8] sm:$0xff]
        %v869 = vld [vmem:[#allocation2 + $0x100] sm:$0xff]
        %v870 = vld [vmem:[#allocation2 + $0x108] sm:$0xff]
        %v871 = vld [vmem:[#allocation2 + $0x110] sm:$0xff]
        %v872 = vld [vmem:[#allocation2 + $0x118] sm:$0xff]
        %v873 = vld [vmem:[#allocation2 + $0x120] sm:$0xff]
        %v874 = vld [vmem:[#allocation2 + $0x128] sm:$0xff]
        %v875 = vld [vmem:[#allocation2 + $0x130] sm:$0xff]
        %v876 = vld [vmem:[#allocation2 + $0x138] sm:$0xf]
        %v877 = vld [vmem:[#allocation2 + $0x140] sm:$0xf]
        %v878 = vld [vmem:[#allocation2 + $0x148] sm:$0xf]
        %v879 = vld [vmem:[%s2] sm:$0xff]
        %881 = vset.pattern.permute.xlu0 0
        %882 = vperm.xlu0 %881, %v879
        %v883 = vpop.permute.xlu0 %882
        %v886 = vsel %vm603, %v836, 0
        %vm888 = vcmask 1043456
        %v890 = vsel %vm888, %v876, 0
        %v893 = vsel %vm888, %v877, 0
        %v896 = vsel %vm888, %v878, 0
        %898 = vmatprep.subr.mxu0 %v838
        %899 = vmatpush1.msra.mxu0 %v837
        %900 = vmatprep.subr.mxu0 %v841
        %901 = vmatpush1.msra.mxu0 %v840
        %902 = vmatprep.subr.mxu0 %v844
        %903 = vmatpush1.msra.mxu0 %v843
        %904 = vmatprep.subr.mxu0 %v847
        %905 = vmatpush1.msra.mxu0 %v846
        %906 = vmatprep.subr.mxu0 %v850
        %907 = vmatpush1.msra.mxu0 %v849
        %908 = vmatprep.subr.mxu0 %v853
        %909 = vmatpush1.msra.mxu0 %v852
        %910 = vmatprep.subr.mxu0 %v856
        %911 = vmatpush1.msra.mxu0 %v855
        %912 = vmatprep.subr.mxu0 %v859
        %913 = vmatpush1.msra.mxu0 %v858
        %914 = vmatprep.subr.mxu0 %v862
        %915 = vmatpush1.msra.mxu0 %v861
        %916 = vmatprep.subr.mxu0 %v865
        %917 = vmatpush1.msra.mxu0 %v864
        %918 = vmatprep.subr.mxu0 %v868
        %919 = vmatpush1.msra.mxu0 %v867
        %920 = vmatprep.subr.mxu0 %v871
        %921 = vmatpush1.msra.mxu0 %v870
        %922 = vmatprep.subr.mxu0 %v874
        %923 = vmatpush1.msra.mxu0 %v873
        %924 = vmatprep.subr.mxu0 %v893
        %925 = vmatpush1.msra.mxu0 %v890
        %926 = vmatprep.subr.mxu0 0.0
        %927 = vmatpush1.msra.mxu0 0.0
        %928 = vmatprep.subr.mxu0 0.0
        %929 = vmatpush1.msra.mxu0 0.0
        %930 = vmatprep.subr.mxu0 0.0
        %931 = vmatpush1.msra.mxu0 0.0
        %932 = vmatprep.subr.mxu0 0.0
        %933 = vmatpush1.msra.mxu0 0.0
        %934 = vmatprep.subr.mxu0 0.0
        %935 = vmatpush1.msra.mxu0 0.0
        %936 = vmatprep.subr.mxu0 0.0
        %937 = vmatpush1.msra.mxu0 0.0
        %938 = vmatprep.subr.mxu0 0.0
        %939 = vmatpush1.msra.mxu0 0.0
        %940 = vmatprep.subr.mxu0 0.0
        %941 = vmatpush1.msra.mxu0 0.0
        %942 = vmatprep.subr.mxu0 0.0
        %943 = vmatpush1.msra.mxu0 0.0
        %944 = vmatprep.subr.mxu0 0.0
        %945 = vmatpush1.msra.mxu0 0.0
        %946 = vmatprep.subr.mxu0 0.0
        %947 = vmatpush1.msra.mxu0 0.0
        %948 = vmatprep.subr.mxu0 0.0
        %949 = vmatpush1.msra.mxu0 0.0
        %950 = vmatprep.subr.mxu0 0.0
        %951 = vmatpush1.msra.mxu0 0.0
        %952 = vmatprep.subr.mxu0 0.0
        %953 = vmatpush1.msra.mxu0 0.0
        %954 = vmatprep.subr.mxu0 0.0
        %955 = vmatpush1.msra.mxu0 0.0
        %956 = vmatprep.subr.mxu0 0.0
        %957 = vmatpush1.msra.mxu0 0.0
        %958 = vmatprep.subr.mxu0 0.0
        %959 = vmatpush1.msra.mxu0 0.0
        %960 = vmatprep.subr.mxu0 0.0
        %961 = vmatpush1.msra.mxu0 0.0
        %962 = vmatprep.mubr.f32.mxu0 0.0
        %963 = vmatmul.mubr.f32.gmra.mrb[0].mxu0 %v886
        %v964 = vpop.f32.mrb[0].mxu0
        %v965 = vadd.f32 %v883, %v964
        %v966 = vpop.f32.mrb[0].mxu0
        %v967 = vadd.f32 %v883, %v966
        %968 = vdwg.mxu0
        %969 = vmatprep.subr.mxu0 0.0
        %970 = vmatpush1.msra.mxu0 %v839
        %971 = vmatprep.subr.mxu0 0.0
        %972 = vmatpush1.msra.mxu0 %v842
        %973 = vmatprep.subr.mxu0 0.0
        %974 = vmatpush1.msra.mxu0 %v845
        %975 = vmatprep.subr.mxu0 0.0
        %976 = vmatpush1.msra.mxu0 %v848
        %977 = vmatprep.subr.mxu0 0.0
        %978 = vmatpush1.msra.mxu0 %v851
        %979 = vmatprep.subr.mxu0 0.0
        %980 = vmatpush1.msra.mxu0 %v854
        %981 = vmatprep.subr.mxu0 0.0
        %982 = vmatpush1.msra.mxu0 %v857
        %983 = vmatprep.subr.mxu0 0.0
        %984 = vmatpush1.msra.mxu0 %v860
        %985 = vmatprep.subr.mxu0 0.0
        %986 = vmatpush1.msra.mxu0 %v863
        %987 = vmatprep.subr.mxu0 0.0
        %988 = vmatpush1.msra.mxu0 %v866
        %989 = vmatprep.subr.mxu0 0.0
        %990 = vmatpush1.msra.mxu0 %v869
        %991 = vmatprep.subr.mxu0 0.0
        %992 = vmatpush1.msra.mxu0 %v872
        %993 = vmatprep.subr.mxu0 0.0
        %994 = vmatpush1.msra.mxu0 %v875
        %995 = vmatprep.subr.mxu0 0.0
        %996 = vmatpush1.msra.mxu0 %v896
        %997 = vmatprep.subr.mxu0 0.0
        %998 = vmatpush1.msra.mxu0 0.0
        %999 = vmatprep.subr.mxu0 0.0
        %1000 = vmatpush1.msra.mxu0 0.0
        %1001 = vmatprep.subr.mxu0 0.0
        %1002 = vmatpush1.msra.mxu0 0.0
        %1003 = vmatprep.subr.mxu0 0.0
        %1004 = vmatpush1.msra.mxu0 0.0
        %1005 = vmatprep.subr.mxu0 0.0
        %1006 = vmatpush1.msra.mxu0 0.0
        %1007 = vmatprep.subr.mxu0 0.0
        %1008 = vmatpush1.msra.mxu0 0.0
        %1009 = vmatprep.subr.mxu0 0.0
        %1010 = vmatpush1.msra.mxu0 0.0
        %1011 = vmatprep.subr.mxu0 0.0
        %1012 = vmatpush1.msra.mxu0 0.0
        %1013 = vmatprep.subr.mxu0 0.0
        %1014 = vmatpush1.msra.mxu0 0.0
        %1015 = vmatprep.subr.mxu0 0.0
        %1016 = vmatpush1.msra.mxu0 0.0
        %1017 = vmatprep.subr.mxu0 0.0
        %1018 = vmatpush1.msra.mxu0 0.0
        %1019 = vmatprep.subr.mxu0 0.0
        %1020 = vmatpush1.msra.mxu0 0.0
        %1021 = vmatprep.subr.mxu0 0.0
        %1022 = vmatpush1.msra.mxu0 0.0
        %1023 = vmatprep.subr.mxu0 0.0
        %1024 = vmatpush1.msra.mxu0 0.0
        %1025 = vmatprep.subr.mxu0 0.0
        %1026 = vmatpush1.msra.mxu0 0.0
        %1027 = vmatprep.subr.mxu0 0.0
        %1028 = vmatpush1.msra.mxu0 0.0
        %1029 = vmatprep.subr.mxu0 0.0
        %1030 = vmatpush1.msra.mxu0 0.0
        %1031 = vmatprep.subr.mxu0 0.0
        %1032 = vmatpush1.msra.mxu0 0.0
        %1033 = vmatprep.mubr.f32.mxu0 0.0
        %1034 = vmatmul.mubr.f32.gmra.mrb[0].mxu0 %v886
        %v1035 = vpop.f32.mrb[0].mxu0
        %v1036 = vadd.f32 %v883, %v1035
        %v1037 = vpop.f32.mrb[0].mxu0
        %1038 = vdwg.mxu0
        %1039 = vst [vmem:[%s204] sm:$0xff] %v965
        %1040 = vst [vmem:[%s204 + $0x8] sm:$0xff] %v967
        %1041 = vst [vmem:[%s204 + $0x10] sm:$0xff] %v1036
        %s1042 = sand.u32 %s112, 1
        %s1043 = scalar_lea.sflag [#allocation5], %s1042
        %s1044 = sand.u32 %s112, 1
        %s1045 = smul.addr %s1044, 24
        %s1046 = scalar_lea.vmem [#allocation6], %s1045
        // Predicated region
        $region37: #{tpu_custom_call.1} parent=31 // pred_check
          %p1047 = pneg %p122
        $region38: #{tpu_custom_call.1} parent=31 // pred_check_branch
          %1049 = sbr.rel (%p1047) target = $region40
        $region39: #{tpu_custom_call.1} parent=31 // pred_region
          %s1050 = smul.u32 3, %s25
          %s1052 = ssub.s32 384, 384
          %1053 = vsyncadd %s1043, %s1052
          %s1054 = smul.addr %s24, 3
          %s1055 = sadd.s32 %s1050, %s1054
          %s1056 = smul.addr %s1055, 128
          %s1057 = scalar_lea.hbm %s3, %s1056
          %s1059 = sshll.u32 %s1046, 4
          %s1060 = int_to_ptr.vmem [resolvable:$true] %s1059
          %1062 = dma.vmem_to_hbm [thread:$0]  %s1060, 384, %s1057, %s1043
        $region40: #{tpu_custom_call.1} parent=31 // pred_fallthru
          _
      $region32: #{tpu_custom_call.1} parent=5 // pred_fallthru
        _
      %p1063 = scmp.le.s32.totalorder 2, %s15
      // Predicated region
      $region41: #{tpu_custom_call.1} parent=5 // pred_check
        %p1064 = pneg %p1063
      $region42: #{tpu_custom_call.1} parent=5 // pred_check_branch
        %1066 = sbr.rel (%p1064) target = $region44
      $region43: #{tpu_custom_call.1} parent=5 // pred_region
        %s1067 = ssub.s32 %s15, 2
        // Predicated region
        $region45: #{tpu_custom_call.1} parent=43 // pred_check
          %p1068 = pneg %p128
        $region46: #{tpu_custom_call.1} parent=43 // pred_check_branch
          %1070 = sbr.rel (%p1068) target = $region48
        $region47: #{tpu_custom_call.1} parent=43 // pred_region
          %s1071 = sand.u32 %s113, 1
          %s1072 = scalar_lea.sflag [#allocation5], %s1071
          %s1073 = sand.u32 %s113, 1
          %s1074 = smul.addr %s1073, 24
          %s1075 = scalar_lea.vmem [#allocation6], %s1074
          %1076 = dma.done %s1072, 384
        $region48: #{tpu_custom_call.1} parent=43 // pred_fallthru
          _
      $region44: #{tpu_custom_call.1} parent=5 // pred_fallthru
        _
    $region6: #{tpu_custom_call.1} parent=1 // loop_footer
      %s19 = sadd.s32 1, %s15
    $region7: #{tpu_custom_call.1} parent=1 // loop_footer_branch
      %14 = sbr.rel target = $region3
    $region8: #{tpu_custom_call.1} parent=1 // loop_exit
      _
    %1077 = vsyncpa [#allocation4], 1
    %s1078 = scalar_lea.sflag [#allocation4], 1
    %1079 = vsyncpa %s1078, 1
    %1080 = vsyncpa [#allocation5], 1
    %s1081 = scalar_lea.sflag [#allocation5], 1
    %1082 = vsyncpa %s1081, 1

</llo_original>
